<compile_context>
chip_gen: v7x
topology: tpu7x:2x2x1
jax: 0.10.0
libtpu: 0.0.40
codegen_flags: <defaults>
</compile_context>

<pallas_src>
import jax
import jax.numpy as jnp
from jax import lax
from jax.experimental import pallas as pl
from jax.experimental.pallas import tpu as pltpu

IMG_DIM = 100          # int(np.prod(img_shape)) with img_shape = (100,)
IMG_PAD = 128          # img K-dim zero-padded to a lane-aligned 128
ENC_DIM = 32           # opt.enc_dim (synthetic choice)
H1, H2, OUT = 512, 256, 1


def _round_up(x, m):
    return ((x + m - 1) // m) * m


def _leaky_relu_02(x):
    return jnp.where(x > 0, x, 0.2 * x)


def disc_kernel(img_ref, lab_ref,
                w1i_ref, w1l_ref, b1_ref,
                w2_ref, b2_ref,
                w3t_ref, b3_ref,
                out_ref):
    # ---- Layer 1: split matmul (img path K=128 padded, label path K=32). ----
    h1 = jnp.dot(img_ref[...], w1i_ref[...], preferred_element_type=jnp.float32)
    h1 = h1 + jnp.dot(lab_ref[...], w1l_ref[...], preferred_element_type=jnp.float32)
    h1 = h1 + b1_ref[...]
    h1 = _leaky_relu_02(h1)                                  # f32

    # ---- Layer 2: 512 -> 256 ----
    h2 = jnp.dot(h1.astype(jnp.bfloat16), w2_ref[...],
                 preferred_element_type=jnp.float32)
    h2 = h2 + b2_ref[...]
    h2 = _leaky_relu_02(h2)                                  # f32

    # ---- Layer 3: 256 -> 1, computed transposed so the output is lane-dense.
    # (1, 256) x (TM, 256) contracting the 256 axis  ->  (1, TM)
    out_row = lax.dot_general(
        w3t_ref[...], h2.astype(jnp.bfloat16),
        dimension_numbers=(((1,), (1,)), ((), ())),
        preferred_element_type=jnp.float32)
    out_row = out_row + b3_ref[0]                            # scalar bias from SMEM
    out_ref[...] = out_row.reshape(out_ref.shape)


def discriminator_forward(img, labels, kparams, tm=None):
    """img: (B, 100) f32, labels: (B_lab, enc_dim) f32 with B % B_lab == 0."""
    B = img.shape[0]
    B_lab = labels.shape[0]
    assert B % B_lab == 0, "batch must be a multiple of the number of label rows"
    rep = B // B_lab

    w1i, w1l, b1, w2, b2, w3t, b3 = kparams

    # Batch tile: large enough to amortize the MXU, rounded to sublanes.
    if tm is None:
        tm = min(256, _round_up(B, 8))
    B_pad = _round_up(B, tm)
    n_tiles = B_pad // tm

    # img: cast + K-pad (100->128) + batch-pad in one pad over the bf16 cast.
    img_b = jnp.pad(img.astype(jnp.bfloat16),
                    ((0, B_pad - B), (0, IMG_PAD - IMG_DIM)))          # (B_pad, 128)
    # PyTorch: unsqueeze(1).expand(-1, rep, -1).reshape(B, -1)
    # == repeat each label row `rep` consecutive times; then batch-pad.
    lab = jnp.pad(jnp.repeat(labels.astype(jnp.bfloat16), rep, axis=0),
                  ((0, B_pad - B), (0, 0)))                            # (B_pad, enc)

    flops = 2 * B_pad * (IMG_PAD * H1 + ENC_DIM * H1 + H1 * H2 + H2 * OUT)
    bytes_accessed = (img_b.size * 2 + lab.size * 2
                      + (w1i.size + w1l.size + w2.size + w3t.size) * 2
                      + (b1.size + b2.size + b3.size) * 4
                      + B_pad * 4)

    out_slab = pl.pallas_call(
        disc_kernel,
        out_shape=jax.ShapeDtypeStruct((n_tiles, 1, tm), jnp.float32),
        grid=(n_tiles,),
        in_specs=[
            pl.BlockSpec((tm, IMG_PAD), lambda i: (i, 0)),
            pl.BlockSpec((tm, ENC_DIM), lambda i: (i, 0)),
            # Weights / biases: constant index map -> fetched once, VMEM-resident.
            pl.BlockSpec((IMG_PAD, H1), lambda i: (0, 0)),
            pl.BlockSpec((ENC_DIM, H1), lambda i: (0, 0)),
            pl.BlockSpec((1, H1), lambda i: (0, 0)),
            pl.BlockSpec((H1, H2), lambda i: (0, 0)),
            pl.BlockSpec((1, H2), lambda i: (0, 0)),
            pl.BlockSpec((1, H2), lambda i: (0, 0)),
            pl.BlockSpec(memory_space=pltpu.MemorySpace.SMEM),        # b3 scalar
        ],
        out_specs=pl.BlockSpec((1, 1, tm), lambda i: (i, 0, 0)),
        compiler_params=pltpu.CompilerParams(
            dimension_semantics=("parallel",)),
        cost_estimate=pl.CostEstimate(flops=flops, transcendentals=0,
                                      bytes_accessed=bytes_accessed),
    )(img_b, lab, w1i, w1l, b1, w2, b2, w3t, b3)

    # (n_tiles, 1, tm) lane-dense slab -> (B, 1)
    return out_slab.reshape(B_pad, 1)[:B]


def init_params(key):
    """Deterministic PyTorch-style Linear init: U(-1/sqrt(fan_in), 1/sqrt(fan_in)).

    Weights stored (in_features, out_features); biases (1, out_features)."""
    dims = [(ENC_DIM + IMG_DIM, H1), (H1, H2), (H2, OUT)]
    params = []
    for (fan_in, fan_out) in dims:
        key, kw, kb = jax.random.split(key, 3)
        bound = 1.0 / jnp.sqrt(jnp.float32(fan_in))
        w = jax.random.uniform(kw, (fan_in, fan_out), jnp.float32, -bound, bound)
        b = jax.random.uniform(kb, (1, fan_out), jnp.float32, -bound, bound)
        params += [w, b]
    return tuple(params)


def prepare_kernel_params(params):
    """One-time weight prep: split/pad W1, transpose W3, cast weights to bf16."""
    w1, b1, w2, b2, w3, b3 = params
    # Concat order in forward is [img, labels] -> rows 0..99 = img, 100..131 = labels.
    w1_img = jnp.pad(w1[:IMG_DIM], ((0, IMG_PAD - IMG_DIM), (0, 0)))   # (128, 512)
    w1_lab = w1[IMG_DIM:]                                              # (32, 512)
    return (
        w1_img.astype(jnp.bfloat16),
        w1_lab.astype(jnp.bfloat16),
        b1.astype(jnp.float32),                 # (1, 512)
        w2.astype(jnp.bfloat16),                # (512, 256)
        b2.astype(jnp.float32),                 # (1, 256)
        w3.T.astype(jnp.bfloat16),              # (1, 256)
        b3.reshape(-1).astype(jnp.float32),     # (1,)  -> SMEM scalar
    )


def _reference(img, labels, params):
    """Pure-JAX reference mirroring the kernel's bf16 weight/activation quantization."""
    B = img.shape[0]
    rep = B // labels.shape[0]
    w1, b1, w2, b2, w3, b3 = params
    lab = jnp.repeat(labels, rep, axis=0)
    x = jnp.concatenate([img, lab], axis=-1).astype(jnp.bfloat16)
    h = jnp.dot(x, w1.astype(jnp.bfloat16), preferred_element_type=jnp.float32) + b1
    h = jnp.where(h > 0, h, 0.2 * h)
    h = jnp.dot(h.astype(jnp.bfloat16), w2.astype(jnp.bfloat16),
                preferred_element_type=jnp.float32) + b2
    h = jnp.where(h > 0, h, 0.2 * h)
    return jnp.dot(h.astype(jnp.bfloat16), w3.astype(jnp.bfloat16),
                   preferred_element_type=jnp.float32) + b3


if __name__ == "__main__":
    key = jax.random.PRNGKey(0)
    k_img, k_lab, k_par, k_img2, k_lab2 = jax.random.split(key, 5)

    params = init_params(k_par)
    kparams = prepare_kernel_params(params)

    # Case 1: multi-tile grid — 8 label rows, each repeated 4x (B=32), batch tile 8.
    B_lab, rep = 8, 4
    B = B_lab * rep
    img = jax.random.normal(k_img, (B, IMG_DIM), jnp.float32)
    labels = jax.random.normal(k_lab, (B_lab, ENC_DIM), jnp.float32)
    out = jax.block_until_ready(discriminator_forward(img, labels, kparams, tm=8))
    ref = _reference(img, labels, params)
    assert out.shape == (B, 1), out.shape
    assert jnp.allclose(out, ref, atol=2e-3, rtol=2e-3), "case 1 mismatch vs reference"

    # Case 2: ragged batch (B=10) exercising the sublane-padding path + default tile.
    B_lab, rep = 2, 5
    B = B_lab * rep
    img2 = jax.random.normal(k_img2, (B, IMG_DIM), jnp.float32)
    labels2 = jax.random.normal(k_lab2, (B_lab, ENC_DIM), jnp.float32)
    out2 = jax.block_until_ready(discriminator_forward(img2, labels2, kparams))
    ref2 = _reference(img2, labels2, params)
    assert out2.shape == (B, 1), out2.shape
    assert jnp.allclose(out2, ref2, atol=2e-3, rtol=2e-3), "case 2 mismatch vs reference"

    print("KERNEL_OK")
</pallas_src>

<mosaic_0001>
module attributes {stable_mosaic.version = 11 : i64} {
  func.func @disc_kernel(%arg0: i32, %arg1: memref<8x128xbf16, #tpu.memory_space<vmem>>, %arg2: memref<8x32xbf16, #tpu.memory_space<vmem>>, %arg3: memref<128x512xbf16, #tpu.memory_space<vmem>>, %arg4: memref<32x512xbf16, #tpu.memory_space<vmem>>, %arg5: memref<1x512xf32, #tpu.memory_space<vmem>>, %arg6: memref<512x256xbf16, #tpu.memory_space<vmem>>, %arg7: memref<1x256xf32, #tpu.memory_space<vmem>>, %arg8: memref<1x256xbf16, #tpu.memory_space<vmem>>, %arg9: memref<1xf32, #tpu.memory_space<smem>>, %arg10: memref<1x1x8xf32, #tpu.memory_space<vmem>>) attributes {dimension_semantics = [#tpu.dimension_semantics<parallel>], iteration_bounds = array<i64: 4>, scalar_prefetch = 0 : i64, scratch_operands = 0 : i64, tpu.core_type = #tpu.core_type<tc>, window_params = [{transform_indices = @transform_0, window_bounds = array<i64: 8, 128>}, {transform_indices = @transform_1, window_bounds = array<i64: 8, 32>}, {pipeline_mode = #tpu.pipeline_mode<synchronous>, transform_indices = @transform_2, window_bounds = array<i64: 128, 512>}, {pipeline_mode = #tpu.pipeline_mode<synchronous>, transform_indices = @transform_3, window_bounds = array<i64: 32, 512>}, {pipeline_mode = #tpu.pipeline_mode<synchronous>, transform_indices = @transform_4, window_bounds = array<i64: 1, 512>}, {pipeline_mode = #tpu.pipeline_mode<synchronous>, transform_indices = @transform_5, window_bounds = array<i64: 512, 256>}, {pipeline_mode = #tpu.pipeline_mode<synchronous>, transform_indices = @transform_6, window_bounds = array<i64: 1, 256>}, {pipeline_mode = #tpu.pipeline_mode<synchronous>, transform_indices = @transform_7, window_bounds = array<i64: 1, 256>}, {transform_indices = @transform_8, window_bounds = array<i64: 1>}, {transform_indices = @transform_9, window_bounds = array<i64: 1, 1, 8>}]} {
    %c0 = arith.constant 0 : index
    %c0_0 = arith.constant 0 : index
    %0 = vector.load %arg1[%c0, %c0_0] : memref<8x128xbf16, #tpu.memory_space<vmem>>, vector<8x128xbf16>
    %c0_1 = arith.constant 0 : index
    %c0_2 = arith.constant 0 : index
    %1 = vector.load %arg3[%c0_1, %c0_2] : memref<128x512xbf16, #tpu.memory_space<vmem>>, vector<128x512xbf16>
    %cst = arith.constant dense<0.000000e+00> : vector<8x512xf32>
    %2 = tpu.matmul %0, %1, %cst {dimension_numbers = #tpu.dot_dimension_numbers<[1], [0], [0], [1], [0, 0, 1, 1], [], []>} : vector<8x128xbf16>, vector<128x512xbf16>, vector<8x512xf32> -> vector<8x512xf32>
    %c0_3 = arith.constant 0 : index
    %c0_4 = arith.constant 0 : index
    %3 = vector.load %arg2[%c0_3, %c0_4] : memref<8x32xbf16, #tpu.memory_space<vmem>>, vector<8x32xbf16>
    %c0_5 = arith.constant 0 : index
    %c0_6 = arith.constant 0 : index
    %4 = vector.load %arg4[%c0_5, %c0_6] : memref<32x512xbf16, #tpu.memory_space<vmem>>, vector<32x512xbf16>
    %cst_7 = arith.constant dense<0.000000e+00> : vector<8x512xf32>
    %5 = tpu.matmul %3, %4, %cst_7 {dimension_numbers = #tpu.dot_dimension_numbers<[1], [0], [0], [1], [0, 0, 1, 1], [], []>} : vector<8x32xbf16>, vector<32x512xbf16>, vector<8x512xf32> -> vector<8x512xf32>
    %6 = arith.addf %2, %5 : vector<8x512xf32>
    %c0_8 = arith.constant 0 : index
    %c0_9 = arith.constant 0 : index
    %7 = vector.load %arg5[%c0_8, %c0_9] : memref<1x512xf32, #tpu.memory_space<vmem>>, vector<1x512xf32>
    %8 = vector.broadcast %7 : vector<1x512xf32> to vector<8x512xf32>
    %9 = arith.addf %6, %8 : vector<8x512xf32>
    %cst_10 = arith.constant 0.000000e+00 : f32
    %10 = vector.broadcast %cst_10 : f32 to vector<8x512xf32>
    %11 = arith.cmpf ogt, %9, %10 : vector<8x512xf32>
    %cst_11 = arith.constant 2.000000e-01 : f32
    %12 = vector.broadcast %cst_11 : f32 to vector<8x512xf32>
    %13 = arith.mulf %12, %9 : vector<8x512xf32>
    %14 = arith.select %11, %9, %13 : vector<8x512xi1>, vector<8x512xf32>
    %15 = arith.truncf %14 : vector<8x512xf32> to vector<8x512xbf16>
    %c0_12 = arith.constant 0 : index
    %c0_13 = arith.constant 0 : index
    %16 = vector.load %arg6[%c0_12, %c0_13] : memref<512x256xbf16, #tpu.memory_space<vmem>>, vector<512x256xbf16>
    %cst_14 = arith.constant dense<0.000000e+00> : vector<8x256xf32>
    %17 = tpu.matmul %15, %16, %cst_14 {dimension_numbers = #tpu.dot_dimension_numbers<[1], [0], [0], [1], [0, 0, 1, 1], [], []>} : vector<8x512xbf16>, vector<512x256xbf16>, vector<8x256xf32> -> vector<8x256xf32>
    %c0_15 = arith.constant 0 : index
    %c0_16 = arith.constant 0 : index
    %18 = vector.load %arg7[%c0_15, %c0_16] : memref<1x256xf32, #tpu.memory_space<vmem>>, vector<1x256xf32>
    %19 = vector.broadcast %18 : vector<1x256xf32> to vector<8x256xf32>
    %20 = arith.addf %17, %19 : vector<8x256xf32>
    %cst_17 = arith.constant 0.000000e+00 : f32
    %21 = vector.broadcast %cst_17 : f32 to vector<8x256xf32>
    %22 = arith.cmpf ogt, %20, %21 : vector<8x256xf32>
    %cst_18 = arith.constant 2.000000e-01 : f32
    %23 = vector.broadcast %cst_18 : f32 to vector<8x256xf32>
    %24 = arith.mulf %23, %20 : vector<8x256xf32>
    %25 = arith.select %22, %20, %24 : vector<8x256xi1>, vector<8x256xf32>
    %c0_19 = arith.constant 0 : index
    %c0_20 = arith.constant 0 : index
    %26 = vector.load %arg8[%c0_19, %c0_20] : memref<1x256xbf16, #tpu.memory_space<vmem>>, vector<1x256xbf16>
    %27 = arith.truncf %25 : vector<8x256xf32> to vector<8x256xbf16>
    %cst_21 = arith.constant dense<0.000000e+00> : vector<1x8xf32>
    %28 = tpu.matmul %26, %27, %cst_21 {dimension_numbers = #tpu.dot_dimension_numbers<[1], [1], [0], [0], [0, 0, 1, 0], [], []>} : vector<1x256xbf16>, vector<8x256xbf16>, vector<1x8xf32> -> vector<1x8xf32>
    %c0_22 = arith.constant 0 : index
    %29 = memref.load %arg9[%c0_22] : memref<1xf32, #tpu.memory_space<smem>>
    %30 = vector.broadcast %29 : f32 to vector<1x8xf32>
    %31 = arith.addf %28, %30 : vector<1x8xf32>
    %32 = vector.shape_cast %31 : vector<1x8xf32> to vector<1x1x8xf32>
    %c0_23 = arith.constant 0 : index
    %c0_24 = arith.constant 0 : index
    %c0_25 = arith.constant 0 : index
    %33 = vector.load %arg10[%c0_23, %c0_24, %c0_25] : memref<1x1x8xf32, #tpu.memory_space<vmem>>, vector<1x1x8xf32>
    tpu.vector_store %arg10[%c0_23, %c0_24, %c0_25], %32 {strides = array<i32>} : memref<1x1x8xf32, #tpu.memory_space<vmem>>, vector<1x1x8xf32>,
    return
  }
  func.func @transform_0(%arg0: i32) -> (i32, i32) {
    %c0_i32 = arith.constant 0 : i32
    %c0_i32_0 = arith.constant 0 : i32
    return %arg0, %c0_i32 : i32, i32
  }
  func.func @transform_1(%arg0: i32) -> (i32, i32) {
    %c0_i32 = arith.constant 0 : i32
    %c0_i32_0 = arith.constant 0 : i32
    return %arg0, %c0_i32 : i32, i32
  }
  func.func @transform_2(%arg0: i32) -> (i32, i32) {
    %c0_i32 = arith.constant 0 : i32
    %c0_i32_0 = arith.constant 0 : i32
    %c0_i32_1 = arith.constant 0 : i32
    return %c0_i32, %c0_i32_0 : i32, i32
  }
  func.func @transform_3(%arg0: i32) -> (i32, i32) {
    %c0_i32 = arith.constant 0 : i32
    %c0_i32_0 = arith.constant 0 : i32
    %c0_i32_1 = arith.constant 0 : i32
    return %c0_i32, %c0_i32_0 : i32, i32
  }
  func.func @transform_4(%arg0: i32) -> (i32, i32) {
    %c0_i32 = arith.constant 0 : i32
    %c0_i32_0 = arith.constant 0 : i32
    %c0_i32_1 = arith.constant 0 : i32
    return %c0_i32, %c0_i32_0 : i32, i32
  }
  func.func @transform_5(%arg0: i32) -> (i32, i32) {
    %c0_i32 = arith.constant 0 : i32
    %c0_i32_0 = arith.constant 0 : i32
    %c0_i32_1 = arith.constant 0 : i32
    return %c0_i32, %c0_i32_0 : i32, i32
  }
  func.func @transform_6(%arg0: i32) -> (i32, i32) {
    %c0_i32 = arith.constant 0 : i32
    %c0_i32_0 = arith.constant 0 : i32
    %c0_i32_1 = arith.constant 0 : i32
    return %c0_i32, %c0_i32_0 : i32, i32
  }
  func.func @transform_7(%arg0: i32) -> (i32, i32) {
    %c0_i32 = arith.constant 0 : i32
    %c0_i32_0 = arith.constant 0 : i32
    %c0_i32_1 = arith.constant 0 : i32
    return %c0_i32, %c0_i32_0 : i32, i32
  }
  func.func @transform_8(%arg0: i32) -> i32 {
    %c0_i32 = arith.constant 0 : i32
    %c0_i32_0 = arith.constant 0 : i32
    return %c0_i32 : i32
  }
  func.func @transform_9(%arg0: i32) -> (i32, i32, i32) {
    %c0_i32 = arith.constant 0 : i32
    %c0_i32_0 = arith.constant 0 : i32
    %c0_i32_1 = arith.constant 0 : i32
    return %arg0, %c0_i32, %c0_i32_0 : i32, i32, i32
  }
}

</mosaic_0001>

<llo_original>
// kernel: tpu_custom_call.1
$region0: #{tpu_custom_call.1}
  #allocation0 [shape = 'u32[]', space=smem, size = 0x4, offset = 0x4, fixed_abs, tag = 'smem constant byte address 0x4 - core index']
  #allocation1 [shape = 'u32[144,128]{1,0:T(1,128)}', space=vmem, size = 0x12000, scoped, tag = 'internal scratch']
  #allocation2 [shape = 'f32[1]{0:T(128)S(6)}', space=smem, size = 0x200, scoped, tag = 'scoped memory for tpu_custom_call.1']
  %s0 = inlined_call_operand.hbm [shape: bf16[32,128], index: 0, kind: input, shape index: {}]
  %s1 = inlined_call_operand.hbm [shape: bf16[32,32], index: 1, kind: input, shape index: {}]
  %s2 = inlined_call_operand.hbm [shape: bf16[128,512], index: 2, kind: input, shape index: {}]
  %s3 = inlined_call_operand.hbm [shape: bf16[32,512], index: 3, kind: input, shape index: {}]
  %s4 = inlined_call_operand.vmem [shape: f32[1,512], index: 4, kind: input, shape index: {}]
  %s5 = inlined_call_operand.hbm [shape: bf16[512,256], index: 5, kind: input, shape index: {}]
  %s6 = inlined_call_operand.vmem [shape: f32[1,256], index: 6, kind: input, shape index: {}]
  %s7 = inlined_call_operand.vmem [shape: bf16[1,256], index: 7, kind: input, shape index: {}]
  %s8 = inlined_call_operand.<no memory space> [shape: f32[1], index: 8, kind: input, shape index: {}]
  %s9 = inlined_call_operand.hbm [shape: f32[4,1,8], index: 9, kind: output, shape index: {}]
  %s10 = sld [smem:[#allocation0]]
  $region89: #{tpu_custom_call.1} parent=0
    _
  %s12 = ssub.s32 1, %s10
  %s13 = scalar_select 0, %s12, %s10
  %14 = sst [smem:[#allocation2]] %s8
  $region1: #{tpu_custom_call.1} parent=0
    #allocation3 [shape = 'u8[4096]{0}', space=vmem, size = 0x1000, scoped, tag = 'input window, operand 0']
    #allocation4 [shape = 's32[2]{0}', space=sflag, size = 0x8, scoped, tag = 'scoped memory for tpu_custom_call.1']
    #allocation5 [shape = 's32[2]{0}', space=sflag, size = 0x8, scoped, tag = 'scoped memory for tpu_custom_call.1']
    #allocation6 [shape = 'u8[4096]{0}', space=vmem, size = 0x1000, scoped, tag = 'input window, operand 1']
    #allocation7 [shape = 's32[2]{0}', space=sflag, size = 0x8, scoped, tag = 'scoped memory for tpu_custom_call.1']
    #allocation8 [shape = 'u8[131072]{0}', space=vmem, size = 0x20000, scoped, tag = 'input window, operand 2, single buffered']
    #allocation9 [shape = 'u8[32768]{0}', space=vmem, size = 0x8000, scoped, tag = 'input window, operand 3, single buffered']
    #allocation10 [shape = 's32[1]{0}', space=sflag, size = 0x4, scoped, tag = 'scoped memory for tpu_custom_call.1']
    #allocation11 [shape = 'u8[262144]{0}', space=vmem, size = 0x40000, scoped, tag = 'input window, operand 5, single buffered']
    #allocation12 [shape = 'u8[1024]{0}', space=vmem, size = 0x400, scoped, tag = 'output window, operand 0']
    %15 = vsyncpa [#allocation4], 0
    %s16 = scalar_lea.sflag [#allocation4], 1
    %17 = vsyncpa %s16, 0
    %18 = vsyncpa [#allocation7], 0
    %s19 = scalar_lea.sflag [#allocation7], 1
    %20 = vsyncpa %s19, 0
    %21 = vsyncpa [#allocation10], 0
    %22 = vsyncpa [#allocation5], 0
    %s23 = scalar_lea.sflag [#allocation5], 1
    %24 = vsyncpa %s23, 0
    loop: start=0, step=1, limit=6
    $region2: #{tpu_custom_call.1} parent=1 // loop_pre_header
      _
    $region3: #{tpu_custom_call.1} parent=1 // loop_header
      %s26 = sphi 0, %s30
      %p27 = scmp.ge.s32.totalorder %s26, 6
      %s36 = sphi 0, %s38
      %s39 = sphi 0, %s36
      %s40 = sphi 0, %s39
      %s56 = sphi 0, %s40
      %s62 = sphi 0, %s64
      %s65 = sphi 0, %s62
      %s66 = sphi 0, %s65
      %s82 = sphi 0, %s66
      %s86 = sphi 0, %s86
      %s88 = sphi 0, %s86
      %s89 = sphi 0, %s88
      %s103 = sphi 0, %s89
      %s107 = sphi 0, %s107
      %s109 = sphi 0, %s107
      %s110 = sphi 0, %s109
      %s124 = sphi 0, %s110
      %s128 = sphi 0, %s128
      %s130 = sphi 0, %s128
      %s131 = sphi 0, %s130
      %s145 = sphi 0, %s131
      %s149 = sphi 0, %s149
      %s151 = sphi 0, %s149
      %s152 = sphi 0, %s151
      %s166 = sphi 0, %s152
      %s170 = sphi 0, %s170
      %s172 = sphi 0, %s170
      %s173 = sphi 0, %s172
      %s187 = sphi 0, %s173
      %s191 = sphi 0, %s191
      %s193 = sphi 0, %s191
      %s194 = sphi 0, %s193
      %s208 = sphi 0, %s194
      %s212 = sphi 0, %s212
      %s214 = sphi 0, %s212
      %s215 = sphi 0, %s214
      %s229 = sphi 0, %s215
      %s235 = sphi 0, %s237
      %s238 = sphi 0, %s235
      %s239 = sphi 0, %s238
      %s255 = sphi 0, %s239
    $region4: #{tpu_custom_call.1} parent=1 // loop_header_branch
      %29 = sbr.rel (%p27) target = $region8
    $region5: #{tpu_custom_call.1} parent=1 // loop_body
      %s31 = ssub.s32 %s26, 1
      %s32 = ssub.s32 %s26, 2
      %s33 = sadd.s32 %s26, 1
      %s34 = ssub.s32 %s26, %s33
      %p35 = scmp.eq.s32.totalorder %s34, 0
      %s37 = sadd.s32 %s36, 1
      %s38 = scalar_select %p35, %s36, %s37
      %p41 = pneg %p35
      %p42 = scmp.eq.s32.totalorder %s26, 3
      %p43 = por %p41, %p42
      %p44 = scmp.ne.s32.totalorder %s36, %s39
      %p45 = scmp.eq.s32.totalorder %s26, 0
      %p46 = por %p44, %p45
      %p47 = scmp.ne.s32.totalorder %s36, %s39
      %p48 = scmp.eq.s32.totalorder %s31, 3
      %p49 = por %p47, %p48
      %p50 = scmp.ne.s32.totalorder %s39, %s40
      %p51 = scmp.eq.s32.totalorder %s31, 0
      %p52 = por %p50, %p51
      %p53 = scmp.ne.s32.totalorder %s39, %s40
      %p54 = scmp.eq.s32.totalorder %s32, 3
      %p55 = por %p53, %p54
      %p57 = scmp.ne.s32.totalorder %s40, %s56
      %p58 = scmp.eq.s32.totalorder %s32, 0
      %p59 = por %p57, %p58
      %s60 = ssub.s32 %s26, %s33
      %p61 = scmp.eq.s32.totalorder %s60, 0
      %s63 = sadd.s32 %s62, 1
      %s64 = scalar_select %p61, %s62, %s63
      %p67 = pneg %p61
      %p68 = scmp.eq.s32.totalorder %s26, 3
      %p69 = por %p67, %p68
      %p70 = scmp.ne.s32.totalorder %s62, %s65
      %p71 = scmp.eq.s32.totalorder %s26, 0
      %p72 = por %p70, %p71
      %p73 = scmp.ne.s32.totalorder %s62, %s65
      %p74 = scmp.eq.s32.totalorder %s31, 3
      %p75 = por %p73, %p74
      %p76 = scmp.ne.s32.totalorder %s65, %s66
      %p77 = scmp.eq.s32.totalorder %s31, 0
      %p78 = por %p76, %p77
      %p79 = scmp.ne.s32.totalorder %s65, %s66
      %p80 = scmp.eq.s32.totalorder %s32, 3
      %p81 = por %p79, %p80
      %p83 = scmp.ne.s32.totalorder %s66, %s82
      %p84 = scmp.eq.s32.totalorder %s32, 0
      %p85 = por %p83, %p84
      %s87 = sadd.s32 %s86, 1
      %p90 = scmp.eq.s32.totalorder %s26, 3
      %p91 = scmp.ne.s32.totalorder %s86, %s88
      %p92 = scmp.eq.s32.totalorder %s26, 0
      %p93 = por %p91, %p92
      %p94 = scmp.ne.s32.totalorder %s86, %s88
      %p95 = scmp.eq.s32.totalorder %s31, 3
      %p96 = por %p94, %p95
      %p97 = scmp.ne.s32.totalorder %s88, %s89
      %p98 = scmp.eq.s32.totalorder %s31, 0
      %p99 = por %p97, %p98
      %p100 = scmp.ne.s32.totalorder %s88, %s89
      %p101 = scmp.eq.s32.totalorder %s32, 3
      %p102 = por %p100, %p101
      %p104 = scmp.ne.s32.totalorder %s89, %s103
      %p105 = scmp.eq.s32.totalorder %s32, 0
      %p106 = por %p104, %p105
      %s108 = sadd.s32 %s107, 1
      %p111 = scmp.eq.s32.totalorder %s26, 3
      %p112 = scmp.ne.s32.totalorder %s107, %s109
      %p113 = scmp.eq.s32.totalorder %s26, 0
      %p114 = por %p112, %p113
      %p115 = scmp.ne.s32.totalorder %s107, %s109
      %p116 = scmp.eq.s32.totalorder %s31, 3
      %p117 = por %p115, %p116
      %p118 = scmp.ne.s32.totalorder %s109, %s110
      %p119 = scmp.eq.s32.totalorder %s31, 0
      %p120 = por %p118, %p119
      %p121 = scmp.ne.s32.totalorder %s109, %s110
      %p122 = scmp.eq.s32.totalorder %s32, 3
      %p123 = por %p121, %p122
      %p125 = scmp.ne.s32.totalorder %s110, %s124
      %p126 = scmp.eq.s32.totalorder %s32, 0
      %p127 = por %p125, %p126
      %s129 = sadd.s32 %s128, 1
      %p132 = scmp.eq.s32.totalorder %s26, 3
      %p133 = scmp.ne.s32.totalorder %s128, %s130
      %p134 = scmp.eq.s32.totalorder %s26, 0
      %p135 = por %p133, %p134
      %p136 = scmp.ne.s32.totalorder %s128, %s130
      %p137 = scmp.eq.s32.totalorder %s31, 3
      %p138 = por %p136, %p137
      %p139 = scmp.ne.s32.totalorder %s130, %s131
      %p140 = scmp.eq.s32.totalorder %s31, 0
      %p141 = por %p139, %p140
      %p142 = scmp.ne.s32.totalorder %s130, %s131
      %p143 = scmp.eq.s32.totalorder %s32, 3
      %p144 = por %p142, %p143
      %p146 = scmp.ne.s32.totalorder %s131, %s145
      %p147 = scmp.eq.s32.totalorder %s32, 0
      %p148 = por %p146, %p147
      %s150 = sadd.s32 %s149, 1
      %p153 = scmp.eq.s32.totalorder %s26, 3
      %p154 = scmp.ne.s32.totalorder %s149, %s151
      %p155 = scmp.eq.s32.totalorder %s26, 0
      %p156 = por %p154, %p155
      %p157 = scmp.ne.s32.totalorder %s149, %s151
      %p158 = scmp.eq.s32.totalorder %s31, 3
      %p159 = por %p157, %p158
      %p160 = scmp.ne.s32.totalorder %s151, %s152
      %p161 = scmp.eq.s32.totalorder %s31, 0
      %p162 = por %p160, %p161
      %p163 = scmp.ne.s32.totalorder %s151, %s152
      %p164 = scmp.eq.s32.totalorder %s32, 3
      %p165 = por %p163, %p164
      %p167 = scmp.ne.s32.totalorder %s152, %s166
      %p168 = scmp.eq.s32.totalorder %s32, 0
      %p169 = por %p167, %p168
      %s171 = sadd.s32 %s170, 1
      %p174 = scmp.eq.s32.totalorder %s26, 3
      %p175 = scmp.ne.s32.totalorder %s170, %s172
      %p176 = scmp.eq.s32.totalorder %s26, 0
      %p177 = por %p175, %p176
      %p178 = scmp.ne.s32.totalorder %s170, %s172
      %p179 = scmp.eq.s32.totalorder %s31, 3
      %p180 = por %p178, %p179
      %p181 = scmp.ne.s32.totalorder %s172, %s173
      %p182 = scmp.eq.s32.totalorder %s31, 0
      %p183 = por %p181, %p182
      %p184 = scmp.ne.s32.totalorder %s172, %s173
      %p185 = scmp.eq.s32.totalorder %s32, 3
      %p186 = por %p184, %p185
      %p188 = scmp.ne.s32.totalorder %s173, %s187
      %p189 = scmp.eq.s32.totalorder %s32, 0
      %p190 = por %p188, %p189
      %s192 = sadd.s32 %s191, 1
      %p195 = scmp.eq.s32.totalorder %s26, 3
      %p196 = scmp.ne.s32.totalorder %s191, %s193
      %p197 = scmp.eq.s32.totalorder %s26, 0
      %p198 = por %p196, %p197
      %p199 = scmp.ne.s32.totalorder %s191, %s193
      %p200 = scmp.eq.s32.totalorder %s31, 3
      %p201 = por %p199, %p200
      %p202 = scmp.ne.s32.totalorder %s193, %s194
      %p203 = scmp.eq.s32.totalorder %s31, 0
      %p204 = por %p202, %p203
      %p205 = scmp.ne.s32.totalorder %s193, %s194
      %p206 = scmp.eq.s32.totalorder %s32, 3
      %p207 = por %p205, %p206
      %p209 = scmp.ne.s32.totalorder %s194, %s208
      %p210 = scmp.eq.s32.totalorder %s32, 0
      %p211 = por %p209, %p210
      %s213 = sadd.s32 %s212, 1
      %p216 = scmp.eq.s32.totalorder %s26, 3
      %p217 = scmp.ne.s32.totalorder %s212, %s214
      %p218 = scmp.eq.s32.totalorder %s26, 0
      %p219 = por %p217, %p218
      %p220 = scmp.ne.s32.totalorder %s212, %s214
      %p221 = scmp.eq.s32.totalorder %s31, 3
      %p222 = por %p220, %p221
      %p223 = scmp.ne.s32.totalorder %s214, %s215
      %p224 = scmp.eq.s32.totalorder %s31, 0
      %p225 = por %p223, %p224
      %p226 = scmp.ne.s32.totalorder %s214, %s215
      %p227 = scmp.eq.s32.totalorder %s32, 3
      %p228 = por %p226, %p227
      %p230 = scmp.ne.s32.totalorder %s215, %s229
      %p231 = scmp.eq.s32.totalorder %s32, 0
      %p232 = por %p230, %p231
      %s233 = ssub.s32 %s26, %s33
      %p234 = scmp.eq.s32.totalorder %s233, 0
      %s236 = sadd.s32 %s235, 1
      %s237 = scalar_select %p234, %s235, %s236
      %p240 = pneg %p234
      %p241 = scmp.eq.s32.totalorder %s26, 3
      %p242 = por %p240, %p241
      %p243 = scmp.ne.s32.totalorder %s235, %s238
      %p244 = scmp.eq.s32.totalorder %s26, 0
      %p245 = por %p243, %p244
      %p246 = scmp.ne.s32.totalorder %s235, %s238
      %p247 = scmp.eq.s32.totalorder %s31, 3
      %p248 = por %p246, %p247
      %p249 = scmp.ne.s32.totalorder %s238, %s239
      %p250 = scmp.eq.s32.totalorder %s31, 0
      %p251 = por %p249, %p250
      %p252 = scmp.ne.s32.totalorder %s238, %s239
      %p253 = scmp.eq.s32.totalorder %s32, 3
      %p254 = por %p252, %p253
      %p256 = scmp.ne.s32.totalorder %s239, %s255
      %p257 = scmp.eq.s32.totalorder %s32, 0
      %p258 = por %p256, %p257
      %p259 = scmp.le.s32.totalorder 1, %s26
      %p260 = scmp.lt.s32.totalorder %s26, 5
      %p261 = pnand %p259, %p260
      %p262 = pneg %p261
      // Predicated region
      $region9: #{tpu_custom_call.1} parent=5 // pred_check
        _
      $region10: #{tpu_custom_call.1} parent=5 // pred_check_branch
        %264 = sbr.rel (%p261) target = $region12
      $region11: #{tpu_custom_call.1} parent=5 // pred_region
        %s265 = ssub.s32 %s26, 1
        // Predicated region
        $region13: #{tpu_custom_call.1} parent=11 // pred_check
          %p266 = pneg %p99
        $region14: #{tpu_custom_call.1} parent=11 // pred_check_branch
          %268 = sbr.rel (%p266) target = $region16
        $region15: #{tpu_custom_call.1} parent=11 // pred_region
          %s270 = ssub.s32 4096, 4096
          %271 = vsyncadd [#allocation7], %s270
          %s272 = sshll.u32 [#allocation8], 4
          %s273 = int_to_ptr.vmem [resolvable:$true] %s272
          %278 = dma.hbm_to_vmem [thread:$0]  %s2, 4096, %s273, [#allocation7], 256, 256, 16
        $region16: #{tpu_custom_call.1} parent=11 // pred_fallthru
          _
        // Predicated region
        $region17: #{tpu_custom_call.1} parent=11 // pred_check
          %p279 = pneg %p120
        $region18: #{tpu_custom_call.1} parent=11 // pred_check_branch
          %281 = sbr.rel (%p279) target = $region20
        $region19: #{tpu_custom_call.1} parent=11 // pred_region
          %s283 = ssub.s32 1024, 1024
          %284 = vsyncadd [#allocation10], %s283
          %s285 = sshll.u32 [#allocation9], 4
          %s286 = int_to_ptr.vmem [resolvable:$true] %s285
          %291 = dma.hbm_to_vmem [thread:$0]  %s3, 1024, %s286, [#allocation10], 256, 256, 16
        $region20: #{tpu_custom_call.1} parent=11 // pred_fallthru
          _
        // Predicated region
        $region21: #{tpu_custom_call.1} parent=11 // pred_check
          %p292 = pneg %p141
        $region22: #{tpu_custom_call.1} parent=11 // pred_check_branch
          %294 = sbr.rel (%p292) target = $region24
        $region23: #{tpu_custom_call.1} parent=11 // pred_region
          _
        $region24: #{tpu_custom_call.1} parent=11 // pred_fallthru
          _
        // Predicated region
        $region25: #{tpu_custom_call.1} parent=11 // pred_check
          %p295 = pneg %p162
        $region26: #{tpu_custom_call.1} parent=11 // pred_check_branch
          %297 = sbr.rel (%p295) target = $region28
        $region27: #{tpu_custom_call.1} parent=11 // pred_region
          %s299 = ssub.s32 8192, 8192
          %300 = vsyncadd [#allocation10], %s299
          %s301 = sshll.u32 [#allocation11], 4
          %s302 = int_to_ptr.vmem [resolvable:$true] %s301
          %307 = dma.hbm_to_vmem [thread:$0]  %s5, 8192, %s302, [#allocation10], 128, 128, 8
        $region28: #{tpu_custom_call.1} parent=11 // pred_fallthru
          _
        // Predicated region
        $region29: #{tpu_custom_call.1} parent=11 // pred_check
          %p308 = pneg %p183
        $region30: #{tpu_custom_call.1} parent=11 // pred_check_branch
          %310 = sbr.rel (%p308) target = $region32
        $region31: #{tpu_custom_call.1} parent=11 // pred_region
          _
        $region32: #{tpu_custom_call.1} parent=11 // pred_fallthru
          _
        // Predicated region
        $region33: #{tpu_custom_call.1} parent=11 // pred_check
          %p311 = pneg %p204
        $region34: #{tpu_custom_call.1} parent=11 // pred_check_branch
          %313 = sbr.rel (%p311) target = $region36
        $region35: #{tpu_custom_call.1} parent=11 // pred_region
          _
        $region36: #{tpu_custom_call.1} parent=11 // pred_fallthru
          _
        // Predicated region
        $region37: #{tpu_custom_call.1} parent=11 // pred_check
          %p314 = pneg %p225
        $region38: #{tpu_custom_call.1} parent=11 // pred_check_branch
          %316 = sbr.rel (%p314) target = $region40
        $region39: #{tpu_custom_call.1} parent=11 // pred_region
          _
        $region40: #{tpu_custom_call.1} parent=11 // pred_fallthru
          _
      $region12: #{tpu_custom_call.1} parent=5 // pred_fallthru
        _
      %p317 = scmp.lt.s32.totalorder %s26, 4
      // Predicated region
      $region41: #{tpu_custom_call.1} parent=5 // pred_check
        %p318 = pneg %p317
      $region42: #{tpu_custom_call.1} parent=5 // pred_check_branch
        %320 = sbr.rel (%p318) target = $region44
      $region43: #{tpu_custom_call.1} parent=5 // pred_region
        // Predicated region
        $region45: #{tpu_custom_call.1} parent=43 // pred_check
          %p321 = pneg %p46
        $region46: #{tpu_custom_call.1} parent=43 // pred_check_branch
          %323 = sbr.rel (%p321) target = $region48
        $region47: #{tpu_custom_call.1} parent=43 // pred_region
          %s324 = sand.u32 %s36, 1
          %s325 = scalar_lea.sflag [#allocation4], %s324
          %s326 = sand.u32 %s36, 1
          %s327 = smul.addr %s326, 4
          %s328 = scalar_lea.vmem [#allocation3], %s327
          %s330 = ssub.s32 64, 64
          %331 = vsyncadd %s325, %s330
          %s332 = smul.addr %s26, 64
          %s333 = scalar_lea.hbm %s0, %s332
          %s335 = sshll.u32 %s328, 4
          %s336 = int_to_ptr.vmem [resolvable:$true] %s335
          %338 = dma.hbm_to_vmem [thread:$0]  %s333, 64, %s336, %s325
        $region48: #{tpu_custom_call.1} parent=43 // pred_fallthru
          _
        // Predicated region
        $region49: #{tpu_custom_call.1} parent=43 // pred_check
          %p339 = pneg %p72
        $region50: #{tpu_custom_call.1} parent=43 // pred_check_branch
          %341 = sbr.rel (%p339) target = $region52
        $region51: #{tpu_custom_call.1} parent=43 // pred_region
          %s342 = sand.u32 %s26, 1
          %s343 = scalar_lea.sflag [#allocation7], %s342
          %s344 = sand.u32 %s62, 1
          %s345 = smul.addr %s344, 4
          %s346 = scalar_lea.vmem [#allocation6], %s345
          %s348 = ssub.s32 64, 64
          %349 = vsyncadd %s343, %s348
          %s350 = smul.addr %s26, 64
          %s351 = scalar_lea.hbm %s1, %s350
          %s353 = sshll.u32 %s346, 4
          %s354 = int_to_ptr.vmem [resolvable:$true] %s353
          %356 = dma.hbm_to_vmem [thread:$0]  %s351, 64, %s354, %s343
        $region52: #{tpu_custom_call.1} parent=43 // pred_fallthru
          _
      $region44: #{tpu_custom_call.1} parent=5 // pred_fallthru
        _
      %p357 = scmp.le.s32.totalorder 1, %s26
      %p358 = scmp.lt.s32.totalorder %s26, 5
      %p359 = pnand %p357, %p358
      %p360 = pneg %p359
      // Predicated region
      $region53: #{tpu_custom_call.1} parent=5 // pred_check
        _
      $region54: #{tpu_custom_call.1} parent=5 // pred_check_branch
        %362 = sbr.rel (%p359) target = $region56
      $region55: #{tpu_custom_call.1} parent=5 // pred_region
        %s363 = ssub.s32 %s26, 1
        %s364 = sand.u32 %s39, 1
        %s365 = scalar_lea.sflag [#allocation4], %s364
        %s366 = sand.u32 %s39, 1
        %s367 = smul.addr %s366, 4
        %s368 = scalar_lea.vmem [#allocation3], %s367
        // Predicated region
        $region57: #{tpu_custom_call.1} parent=55 // pred_check
          %p369 = pneg %p52
        $region58: #{tpu_custom_call.1} parent=55 // pred_check_branch
          %371 = sbr.rel (%p369) target = $region60
        $region59: #{tpu_custom_call.1} parent=55 // pred_region
          %372 = dma.done %s365, 64
        $region60: #{tpu_custom_call.1} parent=55 // pred_fallthru
          _
        %s373 = sand.u32 %s31, 1
        %s374 = scalar_lea.sflag [#allocation7], %s373
        %s375 = sand.u32 %s65, 1
        %s376 = smul.addr %s375, 4
        %s377 = scalar_lea.vmem [#allocation6], %s376
        // Predicated region
        $region61: #{tpu_custom_call.1} parent=55 // pred_check
          %p378 = pneg %p78
        $region62: #{tpu_custom_call.1} parent=55 // pred_check_branch
          %380 = sbr.rel (%p378) target = $region64
        $region63: #{tpu_custom_call.1} parent=55 // pred_region
          %381 = dma.done %s374, 64
        $region64: #{tpu_custom_call.1} parent=55 // pred_fallthru
          _
        // Predicated region
        $region65: #{tpu_custom_call.1} parent=55 // pred_check
          %p382 = pneg %p99
        $region66: #{tpu_custom_call.1} parent=55 // pred_check_branch
          %384 = sbr.rel (%p382) target = $region68
        $region67: #{tpu_custom_call.1} parent=55 // pred_region
          %385 = dma.done [#allocation7], 4096
        $region68: #{tpu_custom_call.1} parent=55 // pred_fallthru
          _
        // Predicated region
        $region69: #{tpu_custom_call.1} parent=55 // pred_check
          %p386 = pneg %p120
        $region70: #{tpu_custom_call.1} parent=55 // pred_check_branch
          %388 = sbr.rel (%p386) target = $region72
        $region71: #{tpu_custom_call.1} parent=55 // pred_region
          %389 = dma.done [#allocation10], 1024
        $region72: #{tpu_custom_call.1} parent=55 // pred_fallthru
          _
        // Predicated region
        $region73: #{tpu_custom_call.1} parent=55 // pred_check
          %p390 = pneg %p162
        $region74: #{tpu_custom_call.1} parent=55 // pred_check_branch
          %392 = sbr.rel (%p390) target = $region76
        $region75: #{tpu_custom_call.1} parent=55 // pred_region
          %393 = dma.done [#allocation10], 8192
        $region76: #{tpu_custom_call.1} parent=55 // pred_fallthru
          _
        %s394 = sand.u32 %s39, 1
        %s395 = scalar_lea.sflag [#allocation4], %s394
        %s396 = sand.u32 %s39, 1
        %s397 = smul.addr %s396, 4
        %s398 = scalar_lea.vmem [#allocation3], %s397
        %p399 = pneg %p52
        %p400 = pneg %p49
        %s401 = sand.u32 %s31, 1
        %s402 = scalar_lea.sflag [#allocation7], %s401
        %s403 = sand.u32 %s65, 1
        %s404 = smul.addr %s403, 4
        %s405 = scalar_lea.vmem [#allocation6], %s404
        %p406 = pneg %p78
        %p407 = pneg %p75
        %p408 = pneg %p99
        %p409 = pneg %p96
        %p410 = pneg %p120
        %p411 = pneg %p117
        %p412 = pneg %p141
        %p413 = pneg %p138
        %p414 = pneg %p162
        %p415 = pneg %p159
        %p416 = pneg %p183
        %p417 = pneg %p180
        %p418 = pneg %p204
        %p419 = pneg %p201
        %p420 = pneg %p225
        %p421 = pneg %p222
        %p422 = pneg %p251
        %p423 = pneg %p248
        %s424 = sand.u32 %s238, 1
        %s425 = scalar_lea.sflag [#allocation5], %s424
        %s426 = sand.u32 %s238, 1
        %s427 = scalar_lea.vmem [#allocation12], %s426
        %v429 = vld [vmem:[%s368] sm:$0xf]
        %v430 = vld [vmem:[#allocation8] sm:$0xff]
        %v431 = vld [vmem:[#allocation8 + $0x8] sm:$0xff]
        %v432 = vld [vmem:[#allocation8 + $0x10] sm:$0xff]
        %v433 = vld [vmem:[#allocation8 + $0x18] sm:$0xff]
        %v434 = vld [vmem:[#allocation8 + $0x20] sm:$0xff]
        %v435 = vld [vmem:[#allocation8 + $0x28] sm:$0xff]
        %v436 = vld [vmem:[#allocation8 + $0x30] sm:$0xff]
        %v437 = vld [vmem:[#allocation8 + $0x38] sm:$0xff]
        %v438 = vld [vmem:[#allocation8 + $0x40] sm:$0xff]
        %v439 = vld [vmem:[#allocation8 + $0x48] sm:$0xff]
        %v440 = vld [vmem:[#allocation8 + $0x50] sm:$0xff]
        %v441 = vld [vmem:[#allocation8 + $0x58] sm:$0xff]
        %v442 = vld [vmem:[#allocation8 + $0x60] sm:$0xff]
        %v443 = vld [vmem:[#allocation8 + $0x68] sm:$0xff]
        %v444 = vld [vmem:[#allocation8 + $0x70] sm:$0xff]
        %v445 = vld [vmem:[#allocation8 + $0x78] sm:$0xff]
        %v446 = vld [vmem:[#allocation8 + $0x80] sm:$0xff]
        %v447 = vld [vmem:[#allocation8 + $0x88] sm:$0xff]
        %v448 = vld [vmem:[#allocation8 + $0x90] sm:$0xff]
        %v449 = vld [vmem:[#allocation8 + $0x98] sm:$0xff]
        %v450 = vld [vmem:[#allocation8 + $0xa0] sm:$0xff]
        %v451 = vld [vmem:[#allocation8 + $0xa8] sm:$0xff]
        %v452 = vld [vmem:[#allocation8 + $0xb0] sm:$0xff]
        %v453 = vld [vmem:[#allocation8 + $0xb8] sm:$0xff]
        %v454 = vld [vmem:[#allocation8 + $0xc0] sm:$0xff]
        %v455 = vld [vmem:[#allocation8 + $0xc8] sm:$0xff]
        %v456 = vld [vmem:[#allocation8 + $0xd0] sm:$0xff]
        %v457 = vld [vmem:[#allocation8 + $0xd8] sm:$0xff]
        %v458 = vld [vmem:[#allocation8 + $0xe0] sm:$0xff]
        %v459 = vld [vmem:[#allocation8 + $0xe8] sm:$0xff]
        %v460 = vld [vmem:[#allocation8 + $0xf0] sm:$0xff]
        %v461 = vld [vmem:[#allocation8 + $0xf8] sm:$0xff]
        %v462 = vld [vmem:[%s377] sm:$0xf]
        %v463 = vld [vmem:[#allocation9] sm:$0xff]
        %v464 = vld [vmem:[#allocation9 + $0x8] sm:$0xff]
        %v465 = vld [vmem:[#allocation9 + $0x10] sm:$0xff]
        %v466 = vld [vmem:[#allocation9 + $0x18] sm:$0xff]
        %v467 = vld [vmem:[#allocation9 + $0x20] sm:$0xff]
        %v468 = vld [vmem:[#allocation9 + $0x28] sm:$0xff]
        %v469 = vld [vmem:[#allocation9 + $0x30] sm:$0xff]
        %v470 = vld [vmem:[#allocation9 + $0x38] sm:$0xff]
        %v479 = vunpack.c.l.b16 %v463
        %v480 = vunpack.c.h.b16 %v463
        %v481 = vunpack.c.l.b16 %v464
        %v482 = vunpack.c.h.b16 %v464
        %v483 = vunpack.c.l.b16 %v465
        %v484 = vunpack.c.h.b16 %v465
        %v485 = vunpack.c.l.b16 %v466
        %v486 = vunpack.c.h.b16 %v466
        %v487 = vunpack.c.l.b16 %v467
        %v488 = vunpack.c.h.b16 %v467
        %v489 = vunpack.c.l.b16 %v468
        %v490 = vunpack.c.h.b16 %v468
        %v491 = vunpack.c.l.b16 %v469
        %v492 = vunpack.c.h.b16 %v469
        %v493 = vunpack.c.l.b16 %v470
        %v494 = vunpack.c.h.b16 %v470
        %v495 = vpack.c.b16 %v483, %v479
        %v496 = vpack.c.b16 %v484, %v480
        %v497 = vpack.c.b16 %v485, %v481
        %v498 = vpack.c.b16 %v486, %v482
        %v499 = vpack.c.b16 %v491, %v487
        %v500 = vpack.c.b16 %v492, %v488
        %v501 = vpack.c.b16 %v493, %v489
        %v502 = vpack.c.b16 %v494, %v490
        %vm511 = vcmask 261120
        %v513 = vsel %vm511, %v462, 0
        %515 = vmatprep.subr.bf16.mxu0 %v496
        %516 = vmatpush1.bf16.msra.mxu0 %v495
        %517 = vmatprep.subr.bf16.mxu0 %v500
        %518 = vmatpush1.bf16.msra.mxu0 %v499
        %519 = vmatprep.subr.bf16.mxu0 0
        %520 = vmatpush1.bf16.msra.mxu0 0
        %521 = vmatprep.subr.bf16.mxu0 0
        %522 = vmatpush1.bf16.msra.mxu0 0
        %523 = vmatprep.subr.bf16.mxu0 0
        %524 = vmatpush1.bf16.msra.mxu0 0
        %525 = vmatprep.subr.bf16.mxu0 0
        %526 = vmatpush1.bf16.msra.mxu0 0
        %527 = vmatprep.subr.bf16.mxu0 0
        %528 = vmatpush1.bf16.msra.mxu0 0
        %529 = vmatprep.subr.bf16.mxu0 0
        %530 = vmatpush1.bf16.msra.mxu0 0
        %531 = vmatprep.subr.bf16.mxu0 0
        %532 = vmatpush1.bf16.msra.mxu0 0
        %533 = vmatprep.subr.bf16.mxu0 0
        %534 = vmatpush1.bf16.msra.mxu0 0
        %535 = vmatprep.subr.bf16.mxu0 0
        %536 = vmatpush1.bf16.msra.mxu0 0
        %537 = vmatprep.subr.bf16.mxu0 0
        %538 = vmatpush1.bf16.msra.mxu0 0
        %539 = vmatprep.subr.bf16.mxu0 0
        %540 = vmatpush1.bf16.msra.mxu0 0
        %541 = vmatprep.subr.bf16.mxu0 0
        %542 = vmatpush1.bf16.msra.mxu0 0
        %543 = vmatprep.subr.bf16.mxu0 0
        %544 = vmatpush1.bf16.msra.mxu0 0
        %545 = vmatprep.subr.bf16.mxu0 0
        %546 = vmatpush1.bf16.msra.mxu0 0
        %547 = vmatprep.mubr.bf16.mxu0 0
        %548 = vmatmul.mubr.bf16.gmra.mrb[0].mxu0 %v513
        %v549 = vpop.f32.mrb[0].mxu0
        %v550 = vadd.f32 0.0, %v549
        %v551 = vpop.f32.mrb[0].mxu0
        %v552 = vadd.f32 0.0, %v551
        %v553 = vpop.f32.mrb[0].mxu0
        %v554 = vpop.f32.mrb[0].mxu0
        %555 = vdwg.mxu0
        %556 = vmatprep.subr.bf16.mxu0 %v498
        %557 = vmatpush1.bf16.msra.mxu0 %v497
        %558 = vmatprep.subr.bf16.mxu0 %v502
        %559 = vmatpush1.bf16.msra.mxu0 %v501
        %560 = vmatprep.subr.bf16.mxu0 0
        %561 = vmatpush1.bf16.msra.mxu0 0
        %562 = vmatprep.subr.bf16.mxu0 0
        %563 = vmatpush1.bf16.msra.mxu0 0
        %564 = vmatprep.subr.bf16.mxu0 0
        %565 = vmatpush1.bf16.msra.mxu0 0
        %566 = vmatprep.subr.bf16.mxu0 0
        %567 = vmatpush1.bf16.msra.mxu0 0
        %568 = vmatprep.subr.bf16.mxu0 0
        %569 = vmatpush1.bf16.msra.mxu0 0
        %570 = vmatprep.subr.bf16.mxu0 0
        %571 = vmatpush1.bf16.msra.mxu0 0
        %572 = vmatprep.subr.bf16.mxu0 0
        %573 = vmatpush1.bf16.msra.mxu0 0
        %574 = vmatprep.subr.bf16.mxu0 0
        %575 = vmatpush1.bf16.msra.mxu0 0
        %576 = vmatprep.subr.bf16.mxu0 0
        %577 = vmatpush1.bf16.msra.mxu0 0
        %578 = vmatprep.subr.bf16.mxu0 0
        %579 = vmatpush1.bf16.msra.mxu0 0
        %580 = vmatprep.subr.bf16.mxu0 0
        %581 = vmatpush1.bf16.msra.mxu0 0
        %582 = vmatprep.subr.bf16.mxu0 0
        %583 = vmatpush1.bf16.msra.mxu0 0
        %584 = vmatprep.subr.bf16.mxu0 0
        %585 = vmatpush1.bf16.msra.mxu0 0
        %586 = vmatprep.subr.bf16.mxu0 0
        %587 = vmatpush1.bf16.msra.mxu0 0
        %588 = vmatprep.mubr.bf16.mxu0 0
        %589 = vmatmul.mubr.bf16.gmra.mrb[0].mxu0 %v513
        %v590 = vpop.f32.mrb[0].mxu0
        %v591 = vadd.f32 0.0, %v590
        %v592 = vpop.f32.mrb[0].mxu0
        %v593 = vadd.f32 0.0, %v592
        %v594 = vpop.f32.mrb[0].mxu0
        %v595 = vpop.f32.mrb[0].mxu0
        %596 = vdwg.mxu0
        %v629 = vunpack.c.l.b16 %v430
        %v630 = vunpack.c.h.b16 %v430
        %v631 = vunpack.c.l.b16 %v431
        %v632 = vunpack.c.h.b16 %v431
        %v633 = vunpack.c.l.b16 %v432
        %v634 = vunpack.c.h.b16 %v432
        %v635 = vunpack.c.l.b16 %v433
        %v636 = vunpack.c.h.b16 %v433
        %v637 = vunpack.c.l.b16 %v434
        %v638 = vunpack.c.h.b16 %v434
        %v639 = vunpack.c.l.b16 %v435
        %v640 = vunpack.c.h.b16 %v435
        %v641 = vunpack.c.l.b16 %v436
        %v642 = vunpack.c.h.b16 %v436
        %v643 = vunpack.c.l.b16 %v437
        %v644 = vunpack.c.h.b16 %v437
        %v645 = vunpack.c.l.b16 %v438
        %v646 = vunpack.c.h.b16 %v438
        %v647 = vunpack.c.l.b16 %v439
        %v648 = vunpack.c.h.b16 %v439
        %v649 = vunpack.c.l.b16 %v440
        %v650 = vunpack.c.h.b16 %v440
        %v651 = vunpack.c.l.b16 %v441
        %v652 = vunpack.c.h.b16 %v441
        %v653 = vunpack.c.l.b16 %v442
        %v654 = vunpack.c.h.b16 %v442
        %v655 = vunpack.c.l.b16 %v443
        %v656 = vunpack.c.h.b16 %v443
        %v657 = vunpack.c.l.b16 %v444
        %v658 = vunpack.c.h.b16 %v444
        %v659 = vunpack.c.l.b16 %v445
        %v660 = vunpack.c.h.b16 %v445
        %v661 = vunpack.c.l.b16 %v446
        %v662 = vunpack.c.h.b16 %v446
        %v663 = vunpack.c.l.b16 %v447
        %v664 = vunpack.c.h.b16 %v447
        %v665 = vunpack.c.l.b16 %v448
        %v666 = vunpack.c.h.b16 %v448
        %v667 = vunpack.c.l.b16 %v449
        %v668 = vunpack.c.h.b16 %v449
        %v669 = vunpack.c.l.b16 %v450
        %v670 = vunpack.c.h.b16 %v450
        %v671 = vunpack.c.l.b16 %v451
        %v672 = vunpack.c.h.b16 %v451
        %v673 = vunpack.c.l.b16 %v452
        %v674 = vunpack.c.h.b16 %v452
        %v675 = vunpack.c.l.b16 %v453
        %v676 = vunpack.c.h.b16 %v453
        %v677 = vunpack.c.l.b16 %v454
        %v678 = vunpack.c.h.b16 %v454
        %v679 = vunpack.c.l.b16 %v455
        %v680 = vunpack.c.h.b16 %v455
        %v681 = vunpack.c.l.b16 %v456
        %v682 = vunpack.c.h.b16 %v456
        %v683 = vunpack.c.l.b16 %v457
        %v684 = vunpack.c.h.b16 %v457
        %v685 = vunpack.c.l.b16 %v458
        %v686 = vunpack.c.h.b16 %v458
        %v687 = vunpack.c.l.b16 %v459
        %v688 = vunpack.c.h.b16 %v459
        %v689 = vunpack.c.l.b16 %v460
        %v690 = vunpack.c.h.b16 %v460
        %v691 = vunpack.c.l.b16 %v461
        %v692 = vunpack.c.h.b16 %v461
        %v693 = vpack.c.b16 %v633, %v629
        %v694 = vpack.c.b16 %v634, %v630
        %v695 = vpack.c.b16 %v635, %v631
        %v696 = vpack.c.b16 %v636, %v632
        %v697 = vpack.c.b16 %v641, %v637
        %v698 = vpack.c.b16 %v642, %v638
        %v699 = vpack.c.b16 %v643, %v639
        %v700 = vpack.c.b16 %v644, %v640
        %v701 = vpack.c.b16 %v649, %v645
        %v702 = vpack.c.b16 %v650, %v646
        %v703 = vpack.c.b16 %v651, %v647
        %v704 = vpack.c.b16 %v652, %v648
        %v705 = vpack.c.b16 %v657, %v653
        %v706 = vpack.c.b16 %v658, %v654
        %v707 = vpack.c.b16 %v659, %v655
        %v708 = vpack.c.b16 %v660, %v656
        %v709 = vpack.c.b16 %v665, %v661
        %v710 = vpack.c.b16 %v666, %v662
        %v711 = vpack.c.b16 %v667, %v663
        %v712 = vpack.c.b16 %v668, %v664
        %v713 = vpack.c.b16 %v673, %v669
        %v714 = vpack.c.b16 %v674, %v670
        %v715 = vpack.c.b16 %v675, %v671
        %v716 = vpack.c.b16 %v676, %v672
        %v717 = vpack.c.b16 %v681, %v677
        %v718 = vpack.c.b16 %v682, %v678
        %v719 = vpack.c.b16 %v683, %v679
        %v720 = vpack.c.b16 %v684, %v680
        %v721 = vpack.c.b16 %v689, %v685
        %v722 = vpack.c.b16 %v690, %v686
        %v723 = vpack.c.b16 %v691, %v687
        %v724 = vpack.c.b16 %v692, %v688
        %757 = vmatprep.subr.bf16.mxu0 %v694
        %758 = vmatpush1.bf16.msra.mxu0 %v693
        %759 = vmatprep.subr.bf16.mxu0 %v698
        %760 = vmatpush1.bf16.msra.mxu0 %v697
        %761 = vmatprep.subr.bf16.mxu0 %v702
        %762 = vmatpush1.bf16.msra.mxu0 %v701
        %763 = vmatprep.subr.bf16.mxu0 %v706
        %764 = vmatpush1.bf16.msra.mxu0 %v705
        %765 = vmatprep.subr.bf16.mxu0 %v710
        %766 = vmatpush1.bf16.msra.mxu0 %v709
        %767 = vmatprep.subr.bf16.mxu0 %v714
        %768 = vmatpush1.bf16.msra.mxu0 %v713
        %769 = vmatprep.subr.bf16.mxu0 %v718
        %770 = vmatpush1.bf16.msra.mxu0 %v717
        %771 = vmatprep.subr.bf16.mxu0 %v722
        %772 = vmatpush1.bf16.msra.mxu0 %v721
        %773 = vmatprep.subr.bf16.mxu0 0
        %774 = vmatpush1.bf16.msra.mxu0 0
        %775 = vmatprep.subr.bf16.mxu0 0
        %776 = vmatpush1.bf16.msra.mxu0 0
        %777 = vmatprep.subr.bf16.mxu0 0
        %778 = vmatpush1.bf16.msra.mxu0 0
        %779 = vmatprep.subr.bf16.mxu0 0
        %780 = vmatpush1.bf16.msra.mxu0 0
        %781 = vmatprep.subr.bf16.mxu0 0
        %782 = vmatpush1.bf16.msra.mxu0 0
        %783 = vmatprep.subr.bf16.mxu0 0
        %784 = vmatpush1.bf16.msra.mxu0 0
        %785 = vmatprep.subr.bf16.mxu0 0
        %786 = vmatpush1.bf16.msra.mxu0 0
        %787 = vmatprep.subr.bf16.mxu0 0
        %788 = vmatpush1.bf16.msra.mxu0 0
        %789 = vmatprep.mubr.bf16.mxu0 0
        %790 = vmatmul.mubr.bf16.gmra.mrb[0].mxu0 %v429
        %v791 = vpop.f32.mrb[0].mxu0
        %v792 = vadd.f32 %v550, %v791
        %v793 = vpop.f32.mrb[0].mxu0
        %v794 = vadd.f32 %v552, %v793
        %v795 = vpop.f32.mrb[0].mxu0
        %v796 = vpop.f32.mrb[0].mxu0
        %797 = vdwg.mxu0
        %798 = vmatprep.subr.bf16.mxu0 %v696
        %799 = vmatpush1.bf16.msra.mxu0 %v695
        %800 = vmatprep.subr.bf16.mxu0 %v700
        %801 = vmatpush1.bf16.msra.mxu0 %v699
        %802 = vmatprep.subr.bf16.mxu0 %v704
        %803 = vmatpush1.bf16.msra.mxu0 %v703
        %804 = vmatprep.subr.bf16.mxu0 %v708
        %805 = vmatpush1.bf16.msra.mxu0 %v707
        %806 = vmatprep.subr.bf16.mxu0 %v712
        %807 = vmatpush1.bf16.msra.mxu0 %v711
        %808 = vmatprep.subr.bf16.mxu0 %v716
        %809 = vmatpush1.bf16.msra.mxu0 %v715
        %810 = vmatprep.subr.bf16.mxu0 %v720
        %811 = vmatpush1.bf16.msra.mxu0 %v719
        %812 = vmatprep.subr.bf16.mxu0 %v724
        %813 = vmatpush1.bf16.msra.mxu0 %v723
        %814 = vmatprep.subr.bf16.mxu0 0
        %815 = vmatpush1.bf16.msra.mxu0 0
        %816 = vmatprep.subr.bf16.mxu0 0
        %817 = vmatpush1.bf16.msra.mxu0 0
        %818 = vmatprep.subr.bf16.mxu0 0
        %819 = vmatpush1.bf16.msra.mxu0 0
        %820 = vmatprep.subr.bf16.mxu0 0
        %821 = vmatpush1.bf16.msra.mxu0 0
        %822 = vmatprep.subr.bf16.mxu0 0
        %823 = vmatpush1.bf16.msra.mxu0 0
        %824 = vmatprep.subr.bf16.mxu0 0
        %825 = vmatpush1.bf16.msra.mxu0 0
        %826 = vmatprep.subr.bf16.mxu0 0
        %827 = vmatpush1.bf16.msra.mxu0 0
        %828 = vmatprep.subr.bf16.mxu0 0
        %829 = vmatpush1.bf16.msra.mxu0 0
        %830 = vmatprep.mubr.bf16.mxu0 0
        %831 = vmatmul.mubr.bf16.gmra.mrb[0].mxu0 %v429
        %v832 = vpop.f32.mrb[0].mxu0
        %v833 = vadd.f32 %v591, %v832
        %v834 = vpop.f32.mrb[0].mxu0
        %v835 = vadd.f32 %v593, %v834
        %v836 = vpop.f32.mrb[0].mxu0
        %v837 = vpop.f32.mrb[0].mxu0
        %838 = vdwg.mxu0
        %v839 = vld [vmem:[%s4] sm:$0xf]
        %v841 = vlaneseq
        %v842 = vshrl.u32 %v841, 7
        %v843 = vsub.s32 0, %v842
        %v844 = vrot.slane %v839, %v843
        %v845 = vlaneseq
        %v846 = vshrl.u32 %v845, 7
        %v847 = vsub.s32 1, %v846
        %v848 = vrot.slane %v839, %v847
        %v849 = vlaneseq
        %v850 = vshrl.u32 %v849, 7
        %v851 = vsub.s32 2, %v850
        %v852 = vrot.slane %v839, %v851
        %v853 = vlaneseq
        %v854 = vshrl.u32 %v853, 7
        %v855 = vsub.s32 3, %v854
        %v856 = vrot.slane %v839, %v855
        %v861 = vadd.f32 %v792, %v844
        %v862 = vadd.f32 %v794, %v848
        %v863 = vadd.f32 %v833, %v852
        %v864 = vadd.f32 %v835, %v856
        %vm865 = vcmp.gt.f32.partialorder %v861, 0.0
        %vm866 = vcmp.gt.f32.partialorder %v862, 0.0
        %vm867 = vcmp.gt.f32.partialorder %v863, 0.0
        %vm868 = vcmp.gt.f32.partialorder %v864, 0.0
        %v869 = vmul.f32 %v861, 0.2
        %v870 = vmul.f32 %v862, 0.2
        %v871 = vmul.f32 %v863, 0.2
        %v872 = vmul.f32 %v864, 0.2
        %v873 = vsel %vm865, %v861, %v869
        %v874 = vsel %vm866, %v862, %v870
        %v875 = vsel %vm867, %v863, %v871
        %v876 = vsel %vm868, %v864, %v872
        %v877 = vpack.c.bf16 %v873, %v873
        %v878 = vpack.c.bf16 %v874, %v874
        %v879 = vpack.c.bf16 %v875, %v875
        %v880 = vpack.c.bf16 %v876, %v876
        %v881 = vld [vmem:[#allocation11] sm:$0xff]
        %v882 = vld [vmem:[#allocation11 + $0x8] sm:$0xff]
        %v883 = vld [vmem:[#allocation11 + $0x10] sm:$0xff]
        %v884 = vld [vmem:[#allocation11 + $0x18] sm:$0xff]
        %v885 = vld [vmem:[#allocation11 + $0x20] sm:$0xff]
        %v886 = vld [vmem:[#allocation11 + $0x28] sm:$0xff]
        %v887 = vld [vmem:[#allocation11 + $0x30] sm:$0xff]
        %v888 = vld [vmem:[#allocation11 + $0x38] sm:$0xff]
        %v889 = vld [vmem:[#allocation11 + $0x40] sm:$0xff]
        %v890 = vld [vmem:[#allocation11 + $0x48] sm:$0xff]
        %v891 = vld [vmem:[#allocation11 + $0x50] sm:$0xff]
        %v892 = vld [vmem:[#allocation11 + $0x58] sm:$0xff]
        %v893 = vld [vmem:[#allocation11 + $0x60] sm:$0xff]
        %v894 = vld [vmem:[#allocation11 + $0x68] sm:$0xff]
        %v895 = vld [vmem:[#allocation11 + $0x70] sm:$0xff]
        %v896 = vld [vmem:[#allocation11 + $0x78] sm:$0xff]
        %v897 = vld [vmem:[#allocation11 + $0x80] sm:$0xff]
        %v898 = vld [vmem:[#allocation11 + $0x88] sm:$0xff]
        %v899 = vld [vmem:[#allocation11 + $0x90] sm:$0xff]
        %v900 = vld [vmem:[#allocation11 + $0x98] sm:$0xff]
        %v901 = vld [vmem:[#allocation11 + $0xa0] sm:$0xff]
        %v902 = vld [vmem:[#allocation11 + $0xa8] sm:$0xff]
        %v903 = vld [vmem:[#allocation11 + $0xb0] sm:$0xff]
        %v904 = vld [vmem:[#allocation11 + $0xb8] sm:$0xff]
        %v905 = vld [vmem:[#allocation11 + $0xc0] sm:$0xff]
        %v906 = vld [vmem:[#allocation11 + $0xc8] sm:$0xff]
        %v907 = vld [vmem:[#allocation11 + $0xd0] sm:$0xff]
        %v908 = vld [vmem:[#allocation11 + $0xd8] sm:$0xff]
        %v909 = vld [vmem:[#allocation11 + $0xe0] sm:$0xff]
        %v910 = vld [vmem:[#allocation11 + $0xe8] sm:$0xff]
        %v911 = vld [vmem:[#allocation11 + $0xf0] sm:$0xff]
        %v912 = vld [vmem:[#allocation11 + $0xf8] sm:$0xff]
        %v913 = vld [vmem:[#allocation11 + $0x100] sm:$0xff]
        %v914 = vld [vmem:[#allocation11 + $0x108] sm:$0xff]
        %v915 = vld [vmem:[#allocation11 + $0x110] sm:$0xff]
        %v916 = vld [vmem:[#allocation11 + $0x118] sm:$0xff]
        %v917 = vld [vmem:[#allocation11 + $0x120] sm:$0xff]
        %v918 = vld [vmem:[#allocation11 + $0x128] sm:$0xff]
        %v919 = vld [vmem:[#allocation11 + $0x130] sm:$0xff]
        %v920 = vld [vmem:[#allocation11 + $0x138] sm:$0xff]
        %v921 = vld [vmem:[#allocation11 + $0x140] sm:$0xff]
        %v922 = vld [vmem:[#allocation11 + $0x148] sm:$0xff]
        %v923 = vld [vmem:[#allocation11 + $0x150] sm:$0xff]
        %v924 = vld [vmem:[#allocation11 + $0x158] sm:$0xff]
        %v925 = vld [vmem:[#allocation11 + $0x160] sm:$0xff]
        %v926 = vld [vmem:[#allocation11 + $0x168] sm:$0xff]
        %v927 = vld [vmem:[#allocation11 + $0x170] sm:$0xff]
        %v928 = vld [vmem:[#allocation11 + $0x178] sm:$0xff]
        %v929 = vld [vmem:[#allocation11 + $0x180] sm:$0xff]
        %v930 = vld [vmem:[#allocation11 + $0x188] sm:$0xff]
        %v931 = vld [vmem:[#allocation11 + $0x190] sm:$0xff]
        %v932 = vld [vmem:[#allocation11 + $0x198] sm:$0xff]
        %v933 = vld [vmem:[#allocation11 + $0x1a0] sm:$0xff]
        %v934 = vld [vmem:[#allocation11 + $0x1a8] sm:$0xff]
        %v935 = vld [vmem:[#allocation11 + $0x1b0] sm:$0xff]
        %v936 = vld [vmem:[#allocation11 + $0x1b8] sm:$0xff]
        %v937 = vld [vmem:[#allocation11 + $0x1c0] sm:$0xff]
        %v938 = vld [vmem:[#allocation11 + $0x1c8] sm:$0xff]
        %v939 = vld [vmem:[#allocation11 + $0x1d0] sm:$0xff]
        %v940 = vld [vmem:[#allocation11 + $0x1d8] sm:$0xff]
        %v941 = vld [vmem:[#allocation11 + $0x1e0] sm:$0xff]
        %v942 = vld [vmem:[#allocation11 + $0x1e8] sm:$0xff]
        %v943 = vld [vmem:[#allocation11 + $0x1f0] sm:$0xff]
        %v944 = vld [vmem:[#allocation11 + $0x1f8] sm:$0xff]
        %v945 = vld [vmem:[%s6] sm:$0x3]
        %v947 = vlaneseq
        %v948 = vshrl.u32 %v947, 7
        %v949 = vsub.s32 0, %v948
        %v950 = vrot.slane %v945, %v949
        %v951 = vlaneseq
        %v952 = vshrl.u32 %v951, 7
        %v953 = vsub.s32 1, %v952
        %v954 = vrot.slane %v945, %v953
        %v1021 = vunpack.c.l.b16 %v881
        %v1022 = vunpack.c.h.b16 %v881
        %v1023 = vunpack.c.l.b16 %v882
        %v1024 = vunpack.c.h.b16 %v882
        %v1025 = vunpack.c.l.b16 %v883
        %v1026 = vunpack.c.h.b16 %v883
        %v1027 = vunpack.c.l.b16 %v884
        %v1028 = vunpack.c.h.b16 %v884
        %v1029 = vunpack.c.l.b16 %v885
        %v1030 = vunpack.c.h.b16 %v885
        %v1031 = vunpack.c.l.b16 %v886
        %v1032 = vunpack.c.h.b16 %v886
        %v1033 = vunpack.c.l.b16 %v887
        %v1034 = vunpack.c.h.b16 %v887
        %v1035 = vunpack.c.l.b16 %v888
        %v1036 = vunpack.c.h.b16 %v888
        %v1037 = vunpack.c.l.b16 %v889
        %v1038 = vunpack.c.h.b16 %v889
        %v1039 = vunpack.c.l.b16 %v890
        %v1040 = vunpack.c.h.b16 %v890
        %v1041 = vunpack.c.l.b16 %v891
        %v1042 = vunpack.c.h.b16 %v891
        %v1043 = vunpack.c.l.b16 %v892
        %v1044 = vunpack.c.h.b16 %v892
        %v1045 = vunpack.c.l.b16 %v893
        %v1046 = vunpack.c.h.b16 %v893
        %v1047 = vunpack.c.l.b16 %v894
        %v1048 = vunpack.c.h.b16 %v894
        %v1049 = vunpack.c.l.b16 %v895
        %v1050 = vunpack.c.h.b16 %v895
        %v1051 = vunpack.c.l.b16 %v896
        %v1052 = vunpack.c.h.b16 %v896
        %v1053 = vunpack.c.l.b16 %v897
        %v1054 = vunpack.c.h.b16 %v897
        %v1055 = vunpack.c.l.b16 %v898
        %v1056 = vunpack.c.h.b16 %v898
        %v1057 = vunpack.c.l.b16 %v899
        %v1058 = vunpack.c.h.b16 %v899
        %v1059 = vunpack.c.l.b16 %v900
        %v1060 = vunpack.c.h.b16 %v900
        %v1061 = vunpack.c.l.b16 %v901
        %v1062 = vunpack.c.h.b16 %v901
        %v1063 = vunpack.c.l.b16 %v902
        %v1064 = vunpack.c.h.b16 %v902
        %v1065 = vunpack.c.l.b16 %v903
        %v1066 = vunpack.c.h.b16 %v903
        %v1067 = vunpack.c.l.b16 %v904
        %v1068 = vunpack.c.h.b16 %v904
        %v1069 = vunpack.c.l.b16 %v905
        %v1070 = vunpack.c.h.b16 %v905
        %v1071 = vunpack.c.l.b16 %v906
        %v1072 = vunpack.c.h.b16 %v906
        %v1073 = vunpack.c.l.b16 %v907
        %v1074 = vunpack.c.h.b16 %v907
        %v1075 = vunpack.c.l.b16 %v908
        %v1076 = vunpack.c.h.b16 %v908
        %v1077 = vunpack.c.l.b16 %v909
        %v1078 = vunpack.c.h.b16 %v909
        %v1079 = vunpack.c.l.b16 %v910
        %v1080 = vunpack.c.h.b16 %v910
        %v1081 = vunpack.c.l.b16 %v911
        %v1082 = vunpack.c.h.b16 %v911
        %v1083 = vunpack.c.l.b16 %v912
        %v1084 = vunpack.c.h.b16 %v912
        %v1085 = vunpack.c.l.b16 %v913
        %v1086 = vunpack.c.h.b16 %v913
        %v1087 = vunpack.c.l.b16 %v914
        %v1088 = vunpack.c.h.b16 %v914
        %v1089 = vunpack.c.l.b16 %v915
        %v1090 = vunpack.c.h.b16 %v915
        %v1091 = vunpack.c.l.b16 %v916
        %v1092 = vunpack.c.h.b16 %v916
        %v1093 = vunpack.c.l.b16 %v917
        %v1094 = vunpack.c.h.b16 %v917
        %v1095 = vunpack.c.l.b16 %v918
        %v1096 = vunpack.c.h.b16 %v918
        %v1097 = vunpack.c.l.b16 %v919
        %v1098 = vunpack.c.h.b16 %v919
        %v1099 = vunpack.c.l.b16 %v920
        %v1100 = vunpack.c.h.b16 %v920
        %v1101 = vunpack.c.l.b16 %v921
        %v1102 = vunpack.c.h.b16 %v921
        %v1103 = vunpack.c.l.b16 %v922
        %v1104 = vunpack.c.h.b16 %v922
        %v1105 = vunpack.c.l.b16 %v923
        %v1106 = vunpack.c.h.b16 %v923
        %v1107 = vunpack.c.l.b16 %v924
        %v1108 = vunpack.c.h.b16 %v924
        %v1109 = vunpack.c.l.b16 %v925
        %v1110 = vunpack.c.h.b16 %v925
        %v1111 = vunpack.c.l.b16 %v926
        %v1112 = vunpack.c.h.b16 %v926
        %v1113 = vunpack.c.l.b16 %v927
        %v1114 = vunpack.c.h.b16 %v927
        %v1115 = vunpack.c.l.b16 %v928
        %v1116 = vunpack.c.h.b16 %v928
        %v1117 = vunpack.c.l.b16 %v929
        %v1118 = vunpack.c.h.b16 %v929
        %v1119 = vunpack.c.l.b16 %v930
        %v1120 = vunpack.c.h.b16 %v930
        %v1121 = vunpack.c.l.b16 %v931
        %v1122 = vunpack.c.h.b16 %v931
        %v1123 = vunpack.c.l.b16 %v932
        %v1124 = vunpack.c.h.b16 %v932
        %v1125 = vunpack.c.l.b16 %v933
        %v1126 = vunpack.c.h.b16 %v933
        %v1127 = vunpack.c.l.b16 %v934
        %v1128 = vunpack.c.h.b16 %v934
        %v1129 = vunpack.c.l.b16 %v935
        %v1130 = vunpack.c.h.b16 %v935
        %v1131 = vunpack.c.l.b16 %v936
        %v1132 = vunpack.c.h.b16 %v936
        %v1133 = vunpack.c.l.b16 %v937
        %v1134 = vunpack.c.h.b16 %v937
        %v1135 = vunpack.c.l.b16 %v938
        %v1136 = vunpack.c.h.b16 %v938
        %v1137 = vunpack.c.l.b16 %v939
        %v1138 = vunpack.c.h.b16 %v939
        %v1139 = vunpack.c.l.b16 %v940
        %v1140 = vunpack.c.h.b16 %v940
        %v1141 = vunpack.c.l.b16 %v941
        %v1142 = vunpack.c.h.b16 %v941
        %v1143 = vunpack.c.l.b16 %v942
        %v1144 = vunpack.c.h.b16 %v942
        %v1145 = vunpack.c.l.b16 %v943
        %v1146 = vunpack.c.h.b16 %v943
        %v1147 = vunpack.c.l.b16 %v944
        %v1148 = vunpack.c.h.b16 %v944
        %v1149 = vpack.c.b16 %v1023, %v1021
        %v1150 = vpack.c.b16 %v1024, %v1022
        %v1151 = vpack.c.b16 %v1027, %v1025
        %v1152 = vpack.c.b16 %v1028, %v1026
        %v1153 = vpack.c.b16 %v1031, %v1029
        %v1154 = vpack.c.b16 %v1032, %v1030
        %v1155 = vpack.c.b16 %v1035, %v1033
        %v1156 = vpack.c.b16 %v1036, %v1034
        %v1157 = vpack.c.b16 %v1039, %v1037
        %v1158 = vpack.c.b16 %v1040, %v1038
        %v1159 = vpack.c.b16 %v1043, %v1041
        %v1160 = vpack.c.b16 %v1044, %v1042
        %v1161 = vpack.c.b16 %v1047, %v1045
        %v1162 = vpack.c.b16 %v1048, %v1046
        %v1163 = vpack.c.b16 %v1051, %v1049
        %v1164 = vpack.c.b16 %v1052, %v1050
        %v1165 = vpack.c.b16 %v1055, %v1053
        %v1166 = vpack.c.b16 %v1056, %v1054
        %v1167 = vpack.c.b16 %v1059, %v1057
        %v1168 = vpack.c.b16 %v1060, %v1058
        %v1169 = vpack.c.b16 %v1063, %v1061
        %v1170 = vpack.c.b16 %v1064, %v1062
        %v1171 = vpack.c.b16 %v1067, %v1065
        %v1172 = vpack.c.b16 %v1068, %v1066
        %v1173 = vpack.c.b16 %v1071, %v1069
        %v1174 = vpack.c.b16 %v1072, %v1070
        %v1175 = vpack.c.b16 %v1075, %v1073
        %v1176 = vpack.c.b16 %v1076, %v1074
        %v1177 = vpack.c.b16 %v1079, %v1077
        %v1178 = vpack.c.b16 %v1080, %v1078
        %v1179 = vpack.c.b16 %v1083, %v1081
        %v1180 = vpack.c.b16 %v1084, %v1082
        %v1181 = vpack.c.b16 %v1087, %v1085
        %v1182 = vpack.c.b16 %v1088, %v1086
        %v1183 = vpack.c.b16 %v1091, %v1089
        %v1184 = vpack.c.b16 %v1092, %v1090
        %v1185 = vpack.c.b16 %v1095, %v1093
        %v1186 = vpack.c.b16 %v1096, %v1094
        %v1187 = vpack.c.b16 %v1099, %v1097
        %v1188 = vpack.c.b16 %v1100, %v1098
        %v1189 = vpack.c.b16 %v1103, %v1101
        %v1190 = vpack.c.b16 %v1104, %v1102
        %v1191 = vpack.c.b16 %v1107, %v1105
        %v1192 = vpack.c.b16 %v1108, %v1106
        %v1193 = vpack.c.b16 %v1111, %v1109
        %v1194 = vpack.c.b16 %v1112, %v1110
        %v1195 = vpack.c.b16 %v1115, %v1113
        %v1196 = vpack.c.b16 %v1116, %v1114
        %v1197 = vpack.c.b16 %v1119, %v1117
        %v1198 = vpack.c.b16 %v1120, %v1118
        %v1199 = vpack.c.b16 %v1123, %v1121
        %v1200 = vpack.c.b16 %v1124, %v1122
        %v1201 = vpack.c.b16 %v1127, %v1125
        %v1202 = vpack.c.b16 %v1128, %v1126
        %v1203 = vpack.c.b16 %v1131, %v1129
        %v1204 = vpack.c.b16 %v1132, %v1130
        %v1205 = vpack.c.b16 %v1135, %v1133
        %v1206 = vpack.c.b16 %v1136, %v1134
        %v1207 = vpack.c.b16 %v1139, %v1137
        %v1208 = vpack.c.b16 %v1140, %v1138
        %v1209 = vpack.c.b16 %v1143, %v1141
        %v1210 = vpack.c.b16 %v1144, %v1142
        %v1211 = vpack.c.b16 %v1147, %v1145
        %v1212 = vpack.c.b16 %v1148, %v1146
        %1277 = vmatprep.subr.bf16.mxu0 %v1150
        %1278 = vmatpush1.bf16.msra.mxu0 %v1149
        %1279 = vmatprep.subr.bf16.mxu0 %v1152
        %1280 = vmatpush1.bf16.msra.mxu0 %v1151
        %1281 = vmatprep.subr.bf16.mxu0 %v1154
        %1282 = vmatpush1.bf16.msra.mxu0 %v1153
        %1283 = vmatprep.subr.bf16.mxu0 %v1156
        %1284 = vmatpush1.bf16.msra.mxu0 %v1155
        %1285 = vmatprep.subr.bf16.mxu0 %v1158
        %1286 = vmatpush1.bf16.msra.mxu0 %v1157
        %1287 = vmatprep.subr.bf16.mxu0 %v1160
        %1288 = vmatpush1.bf16.msra.mxu0 %v1159
        %1289 = vmatprep.subr.bf16.mxu0 %v1162
        %1290 = vmatpush1.bf16.msra.mxu0 %v1161
        %1291 = vmatprep.subr.bf16.mxu0 %v1164
        %1292 = vmatpush1.bf16.msra.mxu0 %v1163
        %1293 = vmatprep.subr.bf16.mxu0 %v1166
        %1294 = vmatpush1.bf16.msra.mxu0 %v1165
        %1295 = vmatprep.subr.bf16.mxu0 %v1168
        %1296 = vmatpush1.bf16.msra.mxu0 %v1167
        %1297 = vmatprep.subr.bf16.mxu0 %v1170
        %1298 = vmatpush1.bf16.msra.mxu0 %v1169
        %1299 = vmatprep.subr.bf16.mxu0 %v1172
        %1300 = vmatpush1.bf16.msra.mxu0 %v1171
        %1301 = vmatprep.subr.bf16.mxu0 %v1174
        %1302 = vmatpush1.bf16.msra.mxu0 %v1173
        %1303 = vmatprep.subr.bf16.mxu0 %v1176
        %1304 = vmatpush1.bf16.msra.mxu0 %v1175
        %1305 = vmatprep.subr.bf16.mxu0 %v1178
        %1306 = vmatpush1.bf16.msra.mxu0 %v1177
        %1307 = vmatprep.subr.bf16.mxu0 %v1180
        %1308 = vmatpush1.bf16.msra.mxu0 %v1179
        %1309 = vmatprep.mubr.bf16.mxu0 %v878
        %1310 = vmatmul.mubr.bf16.gmra.mrb[0].mxu0 %v877
        %v1311 = vpop.f32.mrb[0].mxu0
        %v1312 = vadd.f32 %v950, %v1311
        %v1313 = vpop.f32.mrb[0].mxu0
        %v1314 = vadd.f32 %v954, %v1313
        %v1315 = vpop.f32.mrb[0].mxu0
        %v1316 = vpop.f32.mrb[0].mxu0
        %1317 = vdwg.mxu0
        %1318 = vmatprep.subr.bf16.mxu0 %v1182
        %1319 = vmatpush1.bf16.msra.mxu0 %v1181
        %1320 = vmatprep.subr.bf16.mxu0 %v1184
        %1321 = vmatpush1.bf16.msra.mxu0 %v1183
        %1322 = vmatprep.subr.bf16.mxu0 %v1186
        %1323 = vmatpush1.bf16.msra.mxu0 %v1185
        %1324 = vmatprep.subr.bf16.mxu0 %v1188
        %1325 = vmatpush1.bf16.msra.mxu0 %v1187
        %1326 = vmatprep.subr.bf16.mxu0 %v1190
        %1327 = vmatpush1.bf16.msra.mxu0 %v1189
        %1328 = vmatprep.subr.bf16.mxu0 %v1192
        %1329 = vmatpush1.bf16.msra.mxu0 %v1191
        %1330 = vmatprep.subr.bf16.mxu0 %v1194
        %1331 = vmatpush1.bf16.msra.mxu0 %v1193
        %1332 = vmatprep.subr.bf16.mxu0 %v1196
        %1333 = vmatpush1.bf16.msra.mxu0 %v1195
        %1334 = vmatprep.subr.bf16.mxu0 %v1198
        %1335 = vmatpush1.bf16.msra.mxu0 %v1197
        %1336 = vmatprep.subr.bf16.mxu0 %v1200
        %1337 = vmatpush1.bf16.msra.mxu0 %v1199
        %1338 = vmatprep.subr.bf16.mxu0 %v1202
        %1339 = vmatpush1.bf16.msra.mxu0 %v1201
        %1340 = vmatprep.subr.bf16.mxu0 %v1204
        %1341 = vmatpush1.bf16.msra.mxu0 %v1203
        %1342 = vmatprep.subr.bf16.mxu0 %v1206
        %1343 = vmatpush1.bf16.msra.mxu0 %v1205
        %1344 = vmatprep.subr.bf16.mxu0 %v1208
        %1345 = vmatpush1.bf16.msra.mxu0 %v1207
        %1346 = vmatprep.subr.bf16.mxu0 %v1210
        %1347 = vmatpush1.bf16.msra.mxu0 %v1209
        %1348 = vmatprep.subr.bf16.mxu0 %v1212
        %1349 = vmatpush1.bf16.msra.mxu0 %v1211
        %1350 = vmatprep.mubr.bf16.mxu0 %v880
        %1351 = vmatmul.mubr.bf16.gmra.mrb[0].mxu0 %v879
        %v1352 = vpop.f32.mrb[0].mxu0
        %v1353 = vadd.f32 %v1312, %v1352
        %v1354 = vpop.f32.mrb[0].mxu0
        %v1355 = vadd.f32 %v1314, %v1354
        %v1356 = vpop.f32.mrb[0].mxu0
        %v1357 = vpop.f32.mrb[0].mxu0
        %1358 = vdwg.mxu0
        %vm1359 = vcmp.gt.f32.partialorder %v1353, 0.0
        %vm1360 = vcmp.gt.f32.partialorder %v1355, 0.0
        %v1361 = vmul.f32 %v1353, 0.2
        %v1362 = vmul.f32 %v1355, 0.2
        %v1363 = vsel %vm1359, %v1353, %v1361
        %v1364 = vsel %vm1360, %v1355, %v1362
        %v1365 = vld [vmem:[%s7] sm:$0x3]
        %v1366 = vpack.c.bf16 %v1363, %v1363
        %v1367 = vpack.c.bf16 %v1364, %v1364
        %s1368 = sld [smem:[#allocation2]]
        %v1369 = vstv %s1368
        %v1372 = vunpack.c.l.s4 1966171168
        %v1373 = vunpack.c.0.s8 %v1372
        %v1374 = vlaneseq
        %v1375 = vshrl.u32 %v1374, 7
        %v1376 = vsub.s32 %v1373, %v1375
        %v1377 = vrot.slane %v1365, %v1376
        %v1378 = vcombine.high %v1377, %v1377
        %v1380 = vunpack.c.l.s4 1966171168
        %v1381 = vunpack.c.0.s8 %v1380
        %v1382 = vlaneseq
        %v1383 = vshrl.u32 %v1382, 7
        %v1384 = vsub.s32 %v1381, %v1383
        %v1385 = vrot.slane %v1377, %v1384
        %v1387 = vunpack.c.l.s4 1966171168
        %v1388 = vunpack.c.0.s8 %v1387
        %v1389 = vlaneseq
        %v1390 = vshrl.u32 %v1389, 7
        %v1391 = vsub.s32 %v1388, %v1390
        %v1392 = vrot.slane %v1378, %v1391
        %1395 = vmatprep.subr.bf16.mxu0 %v1367
        %1396 = vmatpush1.bf16.xpose.msra.mxu0 %v1366
        %1397 = vmatprep.subr.bf16.mxu0 0
        %1398 = vmatpush1.bf16.xpose.msra.mxu0 0
        %1399 = vmatprep.subr.bf16.mxu0 0
        %1400 = vmatpush1.bf16.xpose.msra.mxu0 0
        %1401 = vmatprep.subr.bf16.mxu0 0
        %1402 = vmatpush1.bf16.xpose.msra.mxu0 0
        %1403 = vmatprep.subr.bf16.mxu0 0
        %1404 = vmatpush1.bf16.xpose.msra.mxu0 0
        %1405 = vmatprep.subr.bf16.mxu0 0
        %1406 = vmatpush1.bf16.xpose.msra.mxu0 0
        %1407 = vmatprep.subr.bf16.mxu0 0
        %1408 = vmatpush1.bf16.xpose.msra.mxu0 0
        %1409 = vmatprep.subr.bf16.mxu0 0
        %1410 = vmatpush1.bf16.xpose.msra.mxu0 0
        %1411 = vmatprep.subr.bf16.mxu0 0
        %1412 = vmatpush1.bf16.xpose.msra.mxu0 0
        %1413 = vmatprep.subr.bf16.mxu0 0
        %1414 = vmatpush1.bf16.xpose.msra.mxu0 0
        %1415 = vmatprep.subr.bf16.mxu0 0
        %1416 = vmatpush1.bf16.xpose.msra.mxu0 0
        %1417 = vmatprep.subr.bf16.mxu0 0
        %1418 = vmatpush1.bf16.xpose.msra.mxu0 0
        %1419 = vmatprep.subr.bf16.mxu0 0
        %1420 = vmatpush1.bf16.xpose.msra.mxu0 0
        %1421 = vmatprep.subr.bf16.mxu0 0
        %1422 = vmatpush1.bf16.xpose.msra.mxu0 0
        %1423 = vmatprep.subr.bf16.mxu0 0
        %1424 = vmatpush1.bf16.xpose.msra.mxu0 0
        %1425 = vmatprep.subr.bf16.mxu0 0
        %1426 = vmatpush1.bf16.xpose.msra.mxu0 0
        %1427 = vmatprep.mubr.bf16.mxu0 %v1392
        %1428 = vmatmul.mubr.bf16.gmra.mrb[0].mxu0 %v1385
        %v1429 = vpop.f32.mrb[0].mxu0
        %v1430 = vadd.f32 %v1369, %v1429
        %v1431 = vpop.f32.mrb[0].mxu0
        %v1432 = vpop.f32.mrb[0].mxu0
        %v1433 = vpop.f32.mrb[0].mxu0
        %1434 = vdwg.mxu0
        %vm1435 = vcmask 57344
        %1436 = vst.msk [vmem:[%s427] sm:$0x1] %vm1435, %v1430
        %s1437 = sand.u32 %s238, 1
        %s1438 = scalar_lea.sflag [#allocation5], %s1437
        %s1439 = sand.u32 %s238, 1
        %s1440 = scalar_lea.vmem [#allocation12], %s1439
        // Predicated region
        $region77: #{tpu_custom_call.1} parent=55 // pred_check
          %p1441 = pneg %p248
        $region78: #{tpu_custom_call.1} parent=55 // pred_check_branch
          %1443 = sbr.rel (%p1441) target = $region80
        $region79: #{tpu_custom_call.1} parent=55 // pred_region
          %s1445 = ssub.s32 16, 16
          %1446 = vsyncadd %s1438, %s1445
          %s1447 = smul.addr %s31, 16
          %s1448 = scalar_lea.hbm %s9, %s1447
          %s1450 = sshll.u32 %s1440, 4
          %s1451 = int_to_ptr.vmem [resolvable:$true] %s1450
          %1453 = dma.vmem_to_hbm [thread:$0]  %s1451, 16, %s1448, %s1438
        $region80: #{tpu_custom_call.1} parent=55 // pred_fallthru
          _
      $region56: #{tpu_custom_call.1} parent=5 // pred_fallthru
        _
      %p1454 = scmp.le.s32.totalorder 2, %s26
      // Predicated region
      $region81: #{tpu_custom_call.1} parent=5 // pred_check
        %p1455 = pneg %p1454
      $region82: #{tpu_custom_call.1} parent=5 // pred_check_branch
        %1457 = sbr.rel (%p1455) target = $region84
      $region83: #{tpu_custom_call.1} parent=5 // pred_region
        %s1458 = ssub.s32 %s26, 2
        // Predicated region
        $region85: #{tpu_custom_call.1} parent=83 // pred_check
          %p1459 = pneg %p254
        $region86: #{tpu_custom_call.1} parent=83 // pred_check_branch
          %1461 = sbr.rel (%p1459) target = $region88
        $region87: #{tpu_custom_call.1} parent=83 // pred_region
          %s1462 = sand.u32 %s239, 1
          %s1463 = scalar_lea.sflag [#allocation5], %s1462
          %s1464 = sand.u32 %s239, 1
          %s1465 = scalar_lea.vmem [#allocation12], %s1464
          %1466 = dma.done %s1463, 16
        $region88: #{tpu_custom_call.1} parent=83 // pred_fallthru
          _
      $region84: #{tpu_custom_call.1} parent=5 // pred_fallthru
        _
    $region6: #{tpu_custom_call.1} parent=1 // loop_footer
      %s30 = sadd.s32 1, %s26
    $region7: #{tpu_custom_call.1} parent=1 // loop_footer_branch
      %25 = sbr.rel target = $region3
    $region8: #{tpu_custom_call.1} parent=1 // loop_exit
      _
    %1467 = vsyncpa [#allocation4], 1
    %s1468 = scalar_lea.sflag [#allocation4], 1
    %1469 = vsyncpa %s1468, 1
    %1470 = vsyncpa [#allocation7], 1
    %s1471 = scalar_lea.sflag [#allocation7], 1
    %1472 = vsyncpa %s1471, 1
    %1473 = vsyncpa [#allocation10], 1
    %1474 = vsyncpa [#allocation5], 1
    %s1475 = scalar_lea.sflag [#allocation5], 1
    %1476 = vsyncpa %s1475, 1

</llo_original>
